<compile_context>
chip_gen: v7x
topology: tpu7x:2x2x1
jax: 0.10.0
libtpu: 0.0.40
codegen_flags: <defaults>
</compile_context>

<pallas_src>
import math

import jax
import jax.numpy as jnp
from jax.experimental import pallas as pl
from jax.experimental.pallas import tpu as pltpu

_LANES = 128      # vreg lane width
_ROW_ALIGN = 32   # row granularity: safe sublane multiple for f32 / bf16 / int8


def _round_up(x, m):
    return ((x + m - 1) // m) * m


def _dice_partial_kernel(logits_ref, targets_ref, inter_ref, denom_ref,
                         acc_inter, acc_denom):
    """Accumulate per-(split, batch) partial sums over the tiled F axis.

    logits_ref / targets_ref : (1, tile_r, 128) blocks of the (N, R, 128) inputs
    inter_ref / denom_ref    : (1, 1, 1, 128) lane-wide partial outputs
    acc_inter / acc_denom    : (tile_r, 128) f32 VMEM scratch accumulators
    """
    k = pl.program_id(2)

    @pl.when(k == 0)
    def _init():
        acc_inter[...] = jnp.zeros_like(acc_inter)
        acc_denom[...] = jnp.zeros_like(acc_denom)

    x = logits_ref[0].astype(jnp.float32)    # upcast bf16 logits in-kernel
    t = targets_ref[0].astype(jnp.float32)   # upcast int8 targets in-kernel

    # Numerically-stable sigmoid: exp only sees -|x| (no overflow / inf).
    # The exp lives on the EUP slot; exact divide keeps the f32 check tight
    # (approx reciprocal is unnecessary — the kernel is HBM-bound).
    z = jnp.exp(-jnp.abs(x))                       # in (0, 1]
    p = jnp.where(x >= 0.0, 1.0, z) / (1.0 + z)    # sigmoid(x)

    # Pure VPU elementwise accumulation; no per-tile XLU reductions.
    acc_inter[...] += p * t
    acc_denom[...] += p + t                        # fused sum(p) + sum(t)

    @pl.when(k == pl.num_programs(2) - 1)
    def _finalize():
        # Single cross-sublane reduce per (split, batch); the cross-lane and
        # cross-split combine is a tiny wrapper epilogue.
        inter_ref[...] = jnp.sum(acc_inter[...], axis=0, keepdims=True)[None, None]
        denom_ref[...] = jnp.sum(acc_denom[...], axis=0, keepdims=True)[None, None]


def soft_dice_loss(logits, targets, *, smooth=1.0, tile_rows=2048):
    """1 - mean_n [ 2*(sum(p*t)+s) / (sum(p)+sum(t)+s) ], p = sigmoid(logits).

    logits : (N, ...) float32 or bfloat16
    targets: (N, ...) same trailing shape; int8 / float — NOT widened here.
    """
    N = logits.shape[0]
    F = math.prod(logits.shape[1:])

    # ---- lane/sublane-dense layout: each batch row becomes (R, 128) ----
    R = pl.cdiv(F, _LANES)

    # v7x has two TensorCores: split the reduction 2-way when big enough.
    # On single-TC v5e/v6e this is just a serial outer loop (neutral).
    n_split = 2 if R >= 2 * _ROW_ALIGN else 1

    tile_rows = max(_ROW_ALIGN, (tile_rows // _ROW_ALIGN) * _ROW_ALIGN)
    rows_per_split = _round_up(pl.cdiv(R, n_split), _ROW_ALIGN)
    tile_r = min(tile_rows, rows_per_split)
    K = pl.cdiv(rows_per_split, tile_r)
    R_pad = n_split * K * tile_r
    F_pad = R_pad * _LANES

    logits_flat = logits.reshape(N, F)
    targets_flat = targets.reshape(N, F)
    if F_pad != F:
        # Pad logits with a large negative value (sigmoid -> exactly 0) and
        # targets with 0, so padded elements contribute nothing to any sum.
        logits_flat = jnp.pad(logits_flat, ((0, 0), (0, F_pad - F)),
                              constant_values=-1e4)
        targets_flat = jnp.pad(targets_flat, ((0, 0), (0, F_pad - F)),
                               constant_values=0)
    logits_r = logits_flat.reshape(N, R_pad, _LANES)
    targets_r = targets_flat.reshape(N, R_pad, _LANES)

    in_block = (1, tile_r, _LANES)
    out_block = (1, 1, 1, _LANES)

    def in_map(s, b, k):
        return (b, s * K + k, 0)

    def out_map(s, b, k):
        return (s, b, 0, 0)

    partial_inter, partial_denom = pl.pallas_call(
        _dice_partial_kernel,
        out_shape=(
            jax.ShapeDtypeStruct((n_split, N, 1, _LANES), jnp.float32),
            jax.ShapeDtypeStruct((n_split, N, 1, _LANES), jnp.float32),
        ),
        grid_spec=pltpu.PrefetchScalarGridSpec(
            num_scalar_prefetch=0,
            grid=(n_split, N, K),
            in_specs=[
                # Default double-buffering; bump to pl.Buffered(3) only if a
                # trace shows exposed DMA at depth 2.
                pl.BlockSpec(in_block, in_map),
                pl.BlockSpec(in_block, in_map),
            ],
            out_specs=[
                pl.BlockSpec(out_block, out_map),
                pl.BlockSpec(out_block, out_map),
            ],
            scratch_shapes=[
                pltpu.VMEM((tile_r, _LANES), jnp.float32),
                pltpu.VMEM((tile_r, _LANES), jnp.float32),
            ],
        ),
        compiler_params=pltpu.CompilerParams(
            dimension_semantics=("parallel", "parallel", "arbitrary"),
            vmem_limit_bytes=32 * 1024 * 1024,
        ),
    )(logits_r, targets_r)

    # Tiny epilogue: combine splits + lanes, then dice score / mean.
    inter = jnp.sum(partial_inter, axis=(0, 2, 3))   # (N,)
    denom = jnp.sum(partial_denom, axis=(0, 2, 3))   # (N,)
    score = 2.0 * (inter + smooth) / (denom + smooth)
    return 1.0 - jnp.sum(score) / N


def _ref_soft_dice_loss(logits, targets, smooth=1.0):
    """Plain-JAX reference, same math as the PyTorch SoftDiceLoss forward."""
    N = logits.shape[0]
    probs = jax.nn.sigmoid(logits.astype(jnp.float32)).reshape(N, -1)
    t = targets.astype(jnp.float32).reshape(N, -1)
    score = 2.0 * ((probs * t).sum(1) + smooth) / (probs.sum(1) + t.sum(1) + smooth)
    return 1.0 - score.sum() / N


if __name__ == "__main__":
    key = jax.random.PRNGKey(0)
    k1, k2, k3, k4 = jax.random.split(key, 4)

    # Small segmentation-head shapes: (N, C, H, W)
    N, C, H, W = 2, 4, 16, 16
    logits = jax.random.normal(k1, (N, C, H, W), dtype=jnp.float32)
    targets = (jax.random.uniform(k2, (N, C, H, W)) > 0.5).astype(jnp.int8)

    loss = jax.block_until_ready(soft_dice_loss(logits, targets))
    ref = _ref_soft_dice_loss(logits, targets)
    assert jnp.allclose(loss, ref, rtol=1e-5, atol=1e-5), (loss, ref)

    # bf16 logits + int8 targets path (narrow HBM streams, upcast in-kernel).
    logits_bf16 = jax.random.normal(k3, (N, C, H, W), dtype=jnp.bfloat16)
    loss_bf16 = jax.block_until_ready(soft_dice_loss(logits_bf16, targets))
    ref_bf16 = _ref_soft_dice_loss(logits_bf16, targets)
    assert jnp.allclose(loss_bf16, ref_bf16, rtol=1e-4, atol=1e-4), (loss_bf16, ref_bf16)

    # Ragged F (not a multiple of 128): exercises the zero-contribution padding.
    logits_rag = jax.random.normal(k4, (2, 3, 10, 10), dtype=jnp.float32)
    targets_rag = (jax.random.uniform(k2, (2, 3, 10, 10)) > 0.5).astype(jnp.int8)
    loss_rag = jax.block_until_ready(soft_dice_loss(logits_rag, targets_rag))
    ref_rag = _ref_soft_dice_loss(logits_rag, targets_rag)
    assert jnp.allclose(loss_rag, ref_rag, rtol=1e-5, atol=1e-5), (loss_rag, ref_rag)

    print("KERNEL_OK")
</pallas_src>

<mosaic_0001>
module attributes {stable_mosaic.version = 11 : i64} {
  func.func @_dice_partial_kernel(%arg0: i32, %arg1: i32, %arg2: i32, %arg3: memref<1x32x128xf32, #tpu.memory_space<vmem>>, %arg4: memref<1x32x128xi8, #tpu.memory_space<vmem>>, %arg5: memref<1x1x1x128xf32, #tpu.memory_space<vmem>>, %arg6: memref<1x1x1x128xf32, #tpu.memory_space<vmem>>, %arg7: memref<32x128xf32, #tpu.memory_space<vmem>>, %arg8: memref<32x128xf32, #tpu.memory_space<vmem>>) attributes {dimension_semantics = [#tpu.dimension_semantics<parallel>, #tpu.dimension_semantics<parallel>, #tpu.dimension_semantics<arbitrary>], iteration_bounds = array<i64: 1, 2, 1>, scalar_prefetch = 0 : i64, scratch_operands = 2 : i64, tpu.core_type = #tpu.core_type<tc>, window_params = [{transform_indices = @transform_0, window_bounds = array<i64: 1, 32, 128>}, {transform_indices = @transform_1, window_bounds = array<i64: 1, 32, 128>}, {transform_indices = @transform_2, window_bounds = array<i64: 1, 1, 1, 128>}, {transform_indices = @transform_3, window_bounds = array<i64: 1, 1, 1, 128>}]} {
    %c0_i32 = arith.constant 0 : i32
    %0 = arith.cmpi eq, %arg2, %c0_i32 : i32
    %1 = arith.extui %0 : i1 to i32
    %c0_i32_0 = arith.constant 0 : i32
    %2 = arith.cmpi ne, %1, %c0_i32_0 : i32
    scf.if %2 {
      %cst_19 = arith.constant 0.000000e+00 : f32
      %30 = vector.broadcast %cst_19 : f32 to vector<32x128xf32>
      %c0_20 = arith.constant 0 : index
      %c0_21 = arith.constant 0 : index
      %31 = vector.load %arg7[%c0_20, %c0_21] : memref<32x128xf32, #tpu.memory_space<vmem>>, vector<32x128xf32>
      tpu.vector_store %arg7[%c0_20, %c0_21], %30 {strides = array<i32>} : memref<32x128xf32, #tpu.memory_space<vmem>>, vector<32x128xf32>,
      %cst_22 = arith.constant 0.000000e+00 : f32
      %32 = vector.broadcast %cst_22 : f32 to vector<32x128xf32>
      %c0_23 = arith.constant 0 : index
      %c0_24 = arith.constant 0 : index
      %33 = vector.load %arg8[%c0_23, %c0_24] : memref<32x128xf32, #tpu.memory_space<vmem>>, vector<32x128xf32>
      tpu.vector_store %arg8[%c0_23, %c0_24], %32 {strides = array<i32>} : memref<32x128xf32, #tpu.memory_space<vmem>>, vector<32x128xf32>,
    } else {
    }
    %c0 = arith.constant 0 : index
    %c0_1 = arith.constant 0 : index
    %c0_2 = arith.constant 0 : index
    %3 = vector.load %arg3[%c0, %c0_1, %c0_2] : memref<1x32x128xf32, #tpu.memory_space<vmem>>, vector<1x32x128xf32>
    %4 = vector.shape_cast %3 : vector<1x32x128xf32> to vector<32x128xf32>
    %c0_3 = arith.constant 0 : index
    %c0_4 = arith.constant 0 : index
    %c0_5 = arith.constant 0 : index
    %5 = vector.load %arg4[%c0_3, %c0_4, %c0_5] : memref<1x32x128xi8, #tpu.memory_space<vmem>>, vector<1x32x128xi8>
    %6 = vector.shape_cast %5 : vector<1x32x128xi8> to vector<32x128xi8>
    %7 = arith.sitofp %6 : vector<32x128xi8> to vector<32x128xf32>
    %8 = math.absf %4 : vector<32x128xf32>
    %cst = arith.constant 0.000000e+00 : f32
    %9 = vector.broadcast %cst : f32 to vector<32x128xf32>
    %10 = arith.subf %9, %8 : vector<32x128xf32>
    %11 = math.exp %10 : vector<32x128xf32>
    %cst_6 = arith.constant 0.000000e+00 : f32
    %12 = vector.broadcast %cst_6 : f32 to vector<32x128xf32>
    %13 = arith.cmpf oge, %4, %12 : vector<32x128xf32>
    %cst_7 = arith.constant 1.000000e+00 : f32
    %14 = vector.broadcast %cst_7 : f32 to vector<32x128xf32>
    %15 = arith.select %13, %14, %11 : vector<32x128xi1>, vector<32x128xf32>
    %cst_8 = arith.constant 1.000000e+00 : f32
    %16 = vector.broadcast %cst_8 : f32 to vector<32x128xf32>
    %17 = arith.addf %16, %11 : vector<32x128xf32>
    %18 = arith.divf %15, %17 : vector<32x128xf32>
    %c0_9 = arith.constant 0 : index
    %c0_10 = arith.constant 0 : index
    %19 = vector.load %arg7[%c0_9, %c0_10] : memref<32x128xf32, #tpu.memory_space<vmem>>, vector<32x128xf32>
    %20 = arith.mulf %18, %7 : vector<32x128xf32>
    %21 = arith.addf %19, %20 : vector<32x128xf32>
    %c0_11 = arith.constant 0 : index
    %c0_12 = arith.constant 0 : index
    %22 = vector.load %arg7[%c0_11, %c0_12] : memref<32x128xf32, #tpu.memory_space<vmem>>, vector<32x128xf32>
    tpu.vector_store %arg7[%c0_11, %c0_12], %21 {strides = array<i32>} : memref<32x128xf32, #tpu.memory_space<vmem>>, vector<32x128xf32>,
    %c0_13 = arith.constant 0 : index
    %c0_14 = arith.constant 0 : index
    %23 = vector.load %arg8[%c0_13, %c0_14] : memref<32x128xf32, #tpu.memory_space<vmem>>, vector<32x128xf32>
    %24 = arith.addf %18, %7 : vector<32x128xf32>
    %25 = arith.addf %23, %24 : vector<32x128xf32>
    %c0_15 = arith.constant 0 : index
    %c0_16 = arith.constant 0 : index
    %26 = vector.load %arg8[%c0_15, %c0_16] : memref<32x128xf32, #tpu.memory_space<vmem>>, vector<32x128xf32>
    tpu.vector_store %arg8[%c0_15, %c0_16], %25 {strides = array<i32>} : memref<32x128xf32, #tpu.memory_space<vmem>>, vector<32x128xf32>,
    %c0_i32_17 = arith.constant 0 : i32
    %27 = arith.cmpi eq, %arg2, %c0_i32_17 : i32
    %28 = arith.extui %27 : i1 to i32
    %c0_i32_18 = arith.constant 0 : i32
    %29 = arith.cmpi ne, %28, %c0_i32_18 : i32
    scf.if %29 {
      %c0_19 = arith.constant 0 : index
      %c0_20 = arith.constant 0 : index
      %30 = vector.load %arg7[%c0_19, %c0_20] : memref<32x128xf32, #tpu.memory_space<vmem>>, vector<32x128xf32>
      %cst_21 = arith.constant dense<0.000000e+00> : vector<128xf32>
      %31 = vector.multi_reduction <add>, %30, %cst_21 [0] : vector<32x128xf32> to vector<128xf32>
      %32 = vector.shape_cast %31 : vector<128xf32> to vector<1x128xf32>
      %33 = vector.shape_cast %32 : vector<1x128xf32> to vector<1x1x1x128xf32>
      %c0_22 = arith.constant 0 : index
      %c0_23 = arith.constant 0 : index
      %c0_24 = arith.constant 0 : index
      %c0_25 = arith.constant 0 : index
      %34 = vector.load %arg5[%c0_22, %c0_23, %c0_24, %c0_25] : memref<1x1x1x128xf32, #tpu.memory_space<vmem>>, vector<1x1x1x128xf32>
      tpu.vector_store %arg5[%c0_22, %c0_23, %c0_24, %c0_25], %33 {strides = array<i32>} : memref<1x1x1x128xf32, #tpu.memory_space<vmem>>, vector<1x1x1x128xf32>,
      %c0_26 = arith.constant 0 : index
      %c0_27 = arith.constant 0 : index
      %35 = vector.load %arg8[%c0_26, %c0_27] : memref<32x128xf32, #tpu.memory_space<vmem>>, vector<32x128xf32>
      %cst_28 = arith.constant dense<0.000000e+00> : vector<128xf32>
      %36 = vector.multi_reduction <add>, %35, %cst_28 [0] : vector<32x128xf32> to vector<128xf32>
      %37 = vector.shape_cast %36 : vector<128xf32> to vector<1x128xf32>
      %38 = vector.shape_cast %37 : vector<1x128xf32> to vector<1x1x1x128xf32>
      %c0_29 = arith.constant 0 : index
      %c0_30 = arith.constant 0 : index
      %c0_31 = arith.constant 0 : index
      %c0_32 = arith.constant 0 : index
      %39 = vector.load %arg6[%c0_29, %c0_30, %c0_31, %c0_32] : memref<1x1x1x128xf32, #tpu.memory_space<vmem>>, vector<1x1x1x128xf32>
      tpu.vector_store %arg6[%c0_29, %c0_30, %c0_31, %c0_32], %38 {strides = array<i32>} : memref<1x1x1x128xf32, #tpu.memory_space<vmem>>, vector<1x1x1x128xf32>,
    } else {
    }
    return
  }
  func.func @transform_0(%arg0: i32, %arg1: i32, %arg2: i32) -> (i32, i32, i32) {
    %c1_i32 = arith.constant 1 : i32
    %0 = arith.muli %arg0, %c1_i32 : i32
    %1 = arith.addi %0, %arg2 : i32
    %c0_i32 = arith.constant 0 : i32
    %c0_i32_0 = arith.constant 0 : i32
    return %arg1, %1, %c0_i32 : i32, i32, i32
  }
  func.func @transform_1(%arg0: i32, %arg1: i32, %arg2: i32) -> (i32, i32, i32) {
    %c1_i32 = arith.constant 1 : i32
    %0 = arith.muli %arg0, %c1_i32 : i32
    %1 = arith.addi %0, %arg2 : i32
    %c0_i32 = arith.constant 0 : i32
    %c0_i32_0 = arith.constant 0 : i32
    return %arg1, %1, %c0_i32 : i32, i32, i32
  }
  func.func @transform_2(%arg0: i32, %arg1: i32, %arg2: i32) -> (i32, i32, i32, i32) {
    %c0_i32 = arith.constant 0 : i32
    %c0_i32_0 = arith.constant 0 : i32
    %c0_i32_1 = arith.constant 0 : i32
    return %arg0, %arg1, %c0_i32, %c0_i32_0 : i32, i32, i32, i32
  }
  func.func @transform_3(%arg0: i32, %arg1: i32, %arg2: i32) -> (i32, i32, i32, i32) {
    %c0_i32 = arith.constant 0 : i32
    %c0_i32_0 = arith.constant 0 : i32
    %c0_i32_1 = arith.constant 0 : i32
    return %arg0, %arg1, %c0_i32, %c0_i32_0 : i32, i32, i32, i32
  }
}

</mosaic_0001>

<llo_original>
// kernel: tpu_custom_call.1
$region0: #{tpu_custom_call.1}
  #allocation0 [shape = 'u32[]', space=smem, size = 0x4, offset = 0x4, fixed_abs, tag = 'smem constant byte address 0x4 - core index']
  #allocation1 [shape = 'u32[144,128]{1,0:T(1,128)}', space=vmem, size = 0x12000, scoped, tag = 'internal scratch']
  #allocation2 [shape = 'f32[32,128]{1,0:T(8,128)}', space=vmem, size = 0x4000, scoped, tag = 'scratch operand']
  #allocation3 [shape = 'f32[32,128]{1,0:T(8,128)}', space=vmem, size = 0x4000, scoped, tag = 'scratch operand']
  %s0 = inlined_call_operand.hbm [shape: f32[2,32,128], index: 0, kind: input, shape index: {}]
  %s1 = inlined_call_operand.hbm [shape: s8[2,32,128], index: 1, kind: input, shape index: {}]
  %s2 = inlined_call_operand.hbm [shape: f32[1,2,1,128], index: 2, kind: output, shape index: {0}]
  %s3 = inlined_call_operand.hbm [shape: f32[1,2,1,128], index: 3, kind: output, shape index: {1}]
  %4 = xla_tuple %s2, %s3
  %s5 = sld [smem:[#allocation0]]
  $region65: #{tpu_custom_call.1} parent=0
    _
  %s7 = ssub.s32 1, %s5
  %s8 = scalar_select 0, %s7, %s5
  $region1: #{tpu_custom_call.1} parent=0
    #allocation4 [shape = 'u8[32768]{0}', space=vmem, size = 0x8000, scoped, tag = 'input window, operand 0']
    #allocation5 [shape = 's32[2]{0}', space=sflag, size = 0x8, scoped, tag = 'scoped memory for tpu_custom_call.1']
    #allocation6 [shape = 's32[2]{0}', space=sflag, size = 0x8, scoped, tag = 'scoped memory for tpu_custom_call.1']
    #allocation7 [shape = 'u8[8192]{0}', space=vmem, size = 0x2000, scoped, tag = 'input window, operand 1']
    #allocation8 [shape = 's32[2]{0}', space=sflag, size = 0x8, scoped, tag = 'scoped memory for tpu_custom_call.1']
    #allocation9 [shape = 'u8[1024]{0}', space=vmem, size = 0x400, scoped, tag = 'output window, operand 0']
    #allocation10 [shape = 'u8[1024]{0}', space=vmem, size = 0x400, scoped, tag = 'output window, operand 1']
    #allocation11 [shape = 's32[2]{0}', space=sflag, size = 0x8, scoped, tag = 'scoped memory for tpu_custom_call.1']
    %9 = vsyncpa [#allocation5], 0
    %s10 = scalar_lea.sflag [#allocation5], 1
    %11 = vsyncpa %s10, 0
    %12 = vsyncpa [#allocation8], 0
    %s13 = scalar_lea.sflag [#allocation8], 1
    %14 = vsyncpa %s13, 0
    %15 = vsyncpa [#allocation6], 0
    %s16 = scalar_lea.sflag [#allocation6], 1
    %17 = vsyncpa %s16, 0
    %18 = vsyncpa [#allocation11], 0
    %s19 = scalar_lea.sflag [#allocation11], 1
    %20 = vsyncpa %s19, 0
    loop: start=0, step=1, limit=4
    $region2: #{tpu_custom_call.1} parent=1 // loop_pre_header
      _
    $region3: #{tpu_custom_call.1} parent=1 // loop_header
      %s22 = sphi 0, %s26
      %p23 = scmp.ge.s32.totalorder %s22, 4
      %s29 = sphi 0, %s48
      %s30 = sphi 0, %s44
      %s31 = sphi 0, %s40
      %s32 = sphi 0, %s29
      %s33 = sphi 0, %s30
      %s34 = sphi 0, %s31
      %s35 = sphi 0, %s32
      %s36 = sphi 0, %s33
      %s37 = sphi 0, %s34
      %s55 = sphi 0, %s57
      %s58 = sphi 0, %s55
      %s59 = sphi 0, %s58
      %s75 = sphi 0, %s59
      %s85 = sphi 0, %s87
      %s88 = sphi 0, %s85
      %s89 = sphi 0, %s88
      %s105 = sphi 0, %s89
      %s113 = sphi 0, %s115
      %s116 = sphi 0, %s113
      %s117 = sphi 0, %s116
      %s133 = sphi 0, %s117
      %s141 = sphi 0, %s143
      %s144 = sphi 0, %s141
      %s145 = sphi 0, %s144
      %s161 = sphi 0, %s145
    $region4: #{tpu_custom_call.1} parent=1 // loop_header_branch
      %25 = sbr.rel (%p23) target = $region8
    $region5: #{tpu_custom_call.1} parent=1 // loop_body
      %s27 = ssub.s32 %s22, 1
      %s28 = ssub.s32 %s22, 2
      %s38 = sadd.s32 1, %s31
      %p39 = scmp.ge.s32.totalorder %s38, 1
      %s40 = scalar_select %p39, 0, %s38
      %s41 = sadd.s32 1, %s30
      %s42 = scalar_select %p39, %s41, %s30
      %p43 = scmp.ge.s32.totalorder %s42, 2
      %s44 = scalar_select %p43, 0, %s42
      %s45 = sadd.s32 1, %s29
      %s46 = scalar_select %p43, %s45, %s29
      %p47 = scmp.ge.s32.totalorder %s46, 1
      %s48 = scalar_select %p47, 0, %s46
      %s49 = sadd.s32 %s29, %s31
      %s50 = sadd.s32 %s48, %s40
      %s51 = ssub.s32 %s30, %s44
      %s52 = ssub.s32 %s49, %s50
      %s53 = sor.u32 %s51, %s52
      %p54 = scmp.eq.s32.totalorder %s53, 0
      %s56 = sadd.s32 %s55, 1
      %s57 = scalar_select %p54, %s55, %s56
      %p60 = pneg %p54
      %p61 = scmp.eq.s32.totalorder %s22, 1
      %p62 = por %p60, %p61
      %p63 = scmp.ne.s32.totalorder %s55, %s58
      %p64 = scmp.eq.s32.totalorder %s22, 0
      %p65 = por %p63, %p64
      %p66 = scmp.ne.s32.totalorder %s55, %s58
      %p67 = scmp.eq.s32.totalorder %s27, 1
      %p68 = por %p66, %p67
      %p69 = scmp.ne.s32.totalorder %s58, %s59
      %p70 = scmp.eq.s32.totalorder %s27, 0
      %p71 = por %p69, %p70
      %p72 = scmp.ne.s32.totalorder %s58, %s59
      %p73 = scmp.eq.s32.totalorder %s28, 1
      %p74 = por %p72, %p73
      %p76 = scmp.ne.s32.totalorder %s59, %s75
      %p77 = scmp.eq.s32.totalorder %s28, 0
      %p78 = por %p76, %p77
      %s79 = sadd.s32 %s29, %s31
      %s80 = sadd.s32 %s48, %s40
      %s81 = ssub.s32 %s30, %s44
      %s82 = ssub.s32 %s79, %s80
      %s83 = sor.u32 %s81, %s82
      %p84 = scmp.eq.s32.totalorder %s83, 0
      %s86 = sadd.s32 %s85, 1
      %s87 = scalar_select %p84, %s85, %s86
      %p90 = pneg %p84
      %p91 = scmp.eq.s32.totalorder %s22, 1
      %p92 = por %p90, %p91
      %p93 = scmp.ne.s32.totalorder %s85, %s88
      %p94 = scmp.eq.s32.totalorder %s22, 0
      %p95 = por %p93, %p94
      %p96 = scmp.ne.s32.totalorder %s85, %s88
      %p97 = scmp.eq.s32.totalorder %s27, 1
      %p98 = por %p96, %p97
      %p99 = scmp.ne.s32.totalorder %s88, %s89
      %p100 = scmp.eq.s32.totalorder %s27, 0
      %p101 = por %p99, %p100
      %p102 = scmp.ne.s32.totalorder %s88, %s89
      %p103 = scmp.eq.s32.totalorder %s28, 1
      %p104 = por %p102, %p103
      %p106 = scmp.ne.s32.totalorder %s89, %s105
      %p107 = scmp.eq.s32.totalorder %s28, 0
      %p108 = por %p106, %p107
      %s109 = ssub.s32 %s29, %s48
      %s110 = ssub.s32 %s30, %s44
      %s111 = sor.u32 %s109, %s110
      %p112 = scmp.eq.s32.totalorder %s111, 0
      %s114 = sadd.s32 %s113, 1
      %s115 = scalar_select %p112, %s113, %s114
      %p118 = pneg %p112
      %p119 = scmp.eq.s32.totalorder %s22, 1
      %p120 = por %p118, %p119
      %p121 = scmp.ne.s32.totalorder %s113, %s116
      %p122 = scmp.eq.s32.totalorder %s22, 0
      %p123 = por %p121, %p122
      %p124 = scmp.ne.s32.totalorder %s113, %s116
      %p125 = scmp.eq.s32.totalorder %s27, 1
      %p126 = por %p124, %p125
      %p127 = scmp.ne.s32.totalorder %s116, %s117
      %p128 = scmp.eq.s32.totalorder %s27, 0
      %p129 = por %p127, %p128
      %p130 = scmp.ne.s32.totalorder %s116, %s117
      %p131 = scmp.eq.s32.totalorder %s28, 1
      %p132 = por %p130, %p131
      %p134 = scmp.ne.s32.totalorder %s117, %s133
      %p135 = scmp.eq.s32.totalorder %s28, 0
      %p136 = por %p134, %p135
      %s137 = ssub.s32 %s29, %s48
      %s138 = ssub.s32 %s30, %s44
      %s139 = sor.u32 %s137, %s138
      %p140 = scmp.eq.s32.totalorder %s139, 0
      %s142 = sadd.s32 %s141, 1
      %s143 = scalar_select %p140, %s141, %s142
      %p146 = pneg %p140
      %p147 = scmp.eq.s32.totalorder %s22, 1
      %p148 = por %p146, %p147
      %p149 = scmp.ne.s32.totalorder %s141, %s144
      %p150 = scmp.eq.s32.totalorder %s22, 0
      %p151 = por %p149, %p150
      %p152 = scmp.ne.s32.totalorder %s141, %s144
      %p153 = scmp.eq.s32.totalorder %s27, 1
      %p154 = por %p152, %p153
      %p155 = scmp.ne.s32.totalorder %s144, %s145
      %p156 = scmp.eq.s32.totalorder %s27, 0
      %p157 = por %p155, %p156
      %p158 = scmp.ne.s32.totalorder %s144, %s145
      %p159 = scmp.eq.s32.totalorder %s28, 1
      %p160 = por %p158, %p159
      %p162 = scmp.ne.s32.totalorder %s145, %s161
      %p163 = scmp.eq.s32.totalorder %s28, 0
      %p164 = por %p162, %p163
      %p165 = scmp.le.s32.totalorder 1, %s22
      %p166 = scmp.lt.s32.totalorder %s22, 3
      %p167 = pnand %p165, %p166
      %p168 = pneg %p167
      // Predicated region
      $region9: #{tpu_custom_call.1} parent=5 // pred_check
        _
      $region10: #{tpu_custom_call.1} parent=5 // pred_check_branch
        %170 = sbr.rel (%p167) target = $region12
      $region11: #{tpu_custom_call.1} parent=5 // pred_region
        %s171 = ssub.s32 %s22, 1
      $region12: #{tpu_custom_call.1} parent=5 // pred_fallthru
        _
      %p172 = scmp.lt.s32.totalorder %s22, 2
      // Predicated region
      $region13: #{tpu_custom_call.1} parent=5 // pred_check
        %p173 = pneg %p172
      $region14: #{tpu_custom_call.1} parent=5 // pred_check_branch
        %175 = sbr.rel (%p173) target = $region16
      $region15: #{tpu_custom_call.1} parent=5 // pred_region
        // Predicated region
        $region17: #{tpu_custom_call.1} parent=15 // pred_check
          %p176 = pneg %p65
        $region18: #{tpu_custom_call.1} parent=15 // pred_check_branch
          %178 = sbr.rel (%p176) target = $region20
        $region19: #{tpu_custom_call.1} parent=15 // pred_region
          %s179 = sand.u32 %s55, 1
          %s180 = scalar_lea.sflag [#allocation5], %s179
          %s181 = sand.u32 %s55, 1
          %s182 = smul.addr %s181, 32
          %s183 = scalar_lea.vmem [#allocation4], %s182
          %s184 = sadd.s32 %s29, %s31
          %s185 = smul.u32 4, %s184
          %s187 = ssub.s32 512, 512
          %188 = vsyncadd %s180, %s187
          %s189 = smul.addr %s30, 4
          %s190 = sadd.s32 %s185, %s189
          %s191 = smul.addr %s190, 128
          %s192 = scalar_lea.hbm %s0, %s191
          %s193 = sshll.u32 %s183, 4
          %s194 = int_to_ptr.vmem [resolvable:$true] %s193
          %199 = dma.hbm_to_vmem [thread:$0]  %s192, 512, %s194, %s180, 128, 128, 8
        $region20: #{tpu_custom_call.1} parent=15 // pred_fallthru
          _
        // Predicated region
        $region21: #{tpu_custom_call.1} parent=15 // pred_check
          %p200 = pneg %p95
        $region22: #{tpu_custom_call.1} parent=15 // pred_check_branch
          %202 = sbr.rel (%p200) target = $region24
        $region23: #{tpu_custom_call.1} parent=15 // pred_region
          %s203 = sand.u32 %s85, 1
          %s204 = scalar_lea.sflag [#allocation8], %s203
          %s205 = sand.u32 %s85, 1
          %s206 = smul.addr %s205, 8
          %s207 = scalar_lea.vmem [#allocation7], %s206
          %s208 = sadd.s32 %s29, %s31
          %s210 = ssub.s32 128, 128
          %211 = vsyncadd %s204, %s210
          %s212 = sadd.s32 %s208, %s30
          %s213 = smul.addr %s212, 128
          %s214 = scalar_lea.hbm %s1, %s213
          %s216 = sshll.u32 %s207, 4
          %s217 = int_to_ptr.vmem [resolvable:$true] %s216
          %219 = dma.hbm_to_vmem [thread:$0]  %s214, 128, %s217, %s204
        $region24: #{tpu_custom_call.1} parent=15 // pred_fallthru
          _
      $region16: #{tpu_custom_call.1} parent=5 // pred_fallthru
        _
      %p220 = scmp.le.s32.totalorder 1, %s22
      %p221 = scmp.lt.s32.totalorder %s22, 3
      %p222 = pnand %p220, %p221
      %p223 = pneg %p222
      // Predicated region
      $region25: #{tpu_custom_call.1} parent=5 // pred_check
        _
      $region26: #{tpu_custom_call.1} parent=5 // pred_check_branch
        %225 = sbr.rel (%p222) target = $region28
      $region27: #{tpu_custom_call.1} parent=5 // pred_region
        %s226 = ssub.s32 %s22, 1
        %s227 = sand.u32 %s58, 1
        %s228 = scalar_lea.sflag [#allocation5], %s227
        %s229 = sand.u32 %s58, 1
        %s230 = smul.addr %s229, 32
        %s231 = scalar_lea.vmem [#allocation4], %s230
        // Predicated region
        $region29: #{tpu_custom_call.1} parent=27 // pred_check
          %p232 = pneg %p71
        $region30: #{tpu_custom_call.1} parent=27 // pred_check_branch
          %234 = sbr.rel (%p232) target = $region32
        $region31: #{tpu_custom_call.1} parent=27 // pred_region
          %235 = dma.done %s228, 512
        $region32: #{tpu_custom_call.1} parent=27 // pred_fallthru
          _
        %s236 = sand.u32 %s88, 1
        %s237 = scalar_lea.sflag [#allocation8], %s236
        %s238 = sand.u32 %s88, 1
        %s239 = smul.addr %s238, 8
        %s240 = scalar_lea.vmem [#allocation7], %s239
        // Predicated region
        $region33: #{tpu_custom_call.1} parent=27 // pred_check
          %p241 = pneg %p101
        $region34: #{tpu_custom_call.1} parent=27 // pred_check_branch
          %243 = sbr.rel (%p241) target = $region36
        $region35: #{tpu_custom_call.1} parent=27 // pred_region
          %244 = dma.done %s237, 128
        $region36: #{tpu_custom_call.1} parent=27 // pred_fallthru
          _
        %s245 = sand.u32 %s58, 1
        %s246 = scalar_lea.sflag [#allocation5], %s245
        %s247 = sand.u32 %s58, 1
        %s248 = smul.addr %s247, 32
        %s249 = scalar_lea.vmem [#allocation4], %s248
        %p250 = pneg %p71
        %p251 = pneg %p68
        %s252 = sand.u32 %s88, 1
        %s253 = scalar_lea.sflag [#allocation8], %s252
        %s254 = sand.u32 %s88, 1
        %s255 = smul.addr %s254, 8
        %s256 = scalar_lea.vmem [#allocation7], %s255
        %p257 = pneg %p101
        %p258 = pneg %p98
        %p259 = pneg %p129
        %p260 = pneg %p126
        %s261 = sand.u32 %s116, 1
        %s262 = scalar_lea.sflag [#allocation6], %s261
        %s263 = sand.u32 %s116, 1
        %s264 = scalar_lea.vmem [#allocation9], %s263
        %p265 = pneg %p157
        %p266 = pneg %p154
        %s267 = sand.u32 %s144, 1
        %s268 = scalar_lea.sflag [#allocation11], %s267
        %s269 = sand.u32 %s144, 1
        %s270 = scalar_lea.vmem [#allocation10], %s269
        %s271 = sadd.s32 %s32, %s34
        %s272 = smul.u32 4, %s271
        %s273 = sadd.s32 %s32, %s34
        %p274 = scmp.eq.s32.totalorder %s34, 0
        // Predicated region
        $region37: #{tpu_custom_call.1} parent=27 // pred_check
          %p275 = pneg %p274
        $region38: #{tpu_custom_call.1} parent=27 // pred_check_branch
          %277 = sbr.rel (%p275) target = $region40
        $region39: #{tpu_custom_call.1} parent=27 // pred_region
          %278 = vst [vmem:[#allocation2] sm:$0xff] 0.0
          %279 = vst [vmem:[#allocation2 + $0x8] sm:$0xff] 0.0
          %280 = vst [vmem:[#allocation2 + $0x10] sm:$0xff] 0.0
          %281 = vst [vmem:[#allocation2 + $0x18] sm:$0xff] 0.0
          %282 = vst [vmem:[#allocation3] sm:$0xff] 0.0
          %283 = vst [vmem:[#allocation3 + $0x8] sm:$0xff] 0.0
          %284 = vst [vmem:[#allocation3 + $0x10] sm:$0xff] 0.0
          %285 = vst [vmem:[#allocation3 + $0x18] sm:$0xff] 0.0
        $region40: #{tpu_custom_call.1} parent=27 // pred_fallthru
          _
        %v286 = vld [vmem:[%s231] sm:$0xff]
        %v287 = vld [vmem:[%s231 + $0x8] sm:$0xff]
        %v288 = vld [vmem:[%s231 + $0x10] sm:$0xff]
        %v289 = vld [vmem:[%s231 + $0x18] sm:$0xff]
        %v290 = vld [vmem:[%s240] sm:$0xff]
        %v291 = vunpack.c.0.s8 %v290
        %v292 = vunpack.c.1.s8 %v290
        %v293 = vunpack.c.2.s8 %v290
        %v294 = vunpack.c.3.s8 %v290
        %v295 = vcvt.s32.f32 %v291
        %v296 = vcvt.s32.f32 %v292
        %v297 = vcvt.s32.f32 %v293
        %v298 = vcvt.s32.f32 %v294
        %v299 = vand.u32 2147483647, %v286
        %v300 = vand.u32 2147483647, %v287
        %v301 = vand.u32 2147483647, %v288
        %v302 = vand.u32 2147483647, %v289
        %v303 = vsub.f32 0.0, %v299
        %v304 = vsub.f32 0.0, %v300
        %v305 = vsub.f32 0.0, %v301
        %v306 = vsub.f32 0.0, %v302
        %v307 = vmul.f32 %v303, 1.442695
        %v308 = vpow.pop %v307
        %v309 = vmul.f32 %v304, 1.442695
        %v310 = vpow.pop %v309
        %v311 = vmul.f32 %v305, 1.442695
        %v312 = vpow.pop %v311
        %v313 = vmul.f32 %v306, 1.442695
        %v314 = vpow.pop %v313
        %vm315 = vcmp.ge.f32.partialorder %v286, 0.0
        %vm316 = vcmp.ge.f32.partialorder %v287, 0.0
        %vm317 = vcmp.ge.f32.partialorder %v288, 0.0
        %vm318 = vcmp.ge.f32.partialorder %v289, 0.0
        %v319 = vsel %vm315, 1.0, %v308
        %v320 = vsel %vm316, 1.0, %v310
        %v321 = vsel %vm317, 1.0, %v312
        %v322 = vsel %vm318, 1.0, %v314
        %v323 = vadd.f32 %v308, 1.0
        %v324 = vadd.f32 %v310, 1.0
        %v325 = vadd.f32 %v312, 1.0
        %v326 = vadd.f32 %v314, 1.0
        %v327 = vrcp.pop %v323
        %v328 = vmul.f32 %v319, %v327
        %v329 = vrcp.pop %v324
        %v330 = vmul.f32 %v320, %v329
        %v331 = vrcp.pop %v325
        %v332 = vmul.f32 %v321, %v331
        %v333 = vrcp.pop %v326
        %v334 = vmul.f32 %v322, %v333
        %v335 = vld [vmem:[#allocation2] sm:$0xff]
        %v336 = vld [vmem:[#allocation2 + $0x8] sm:$0xff]
        %v337 = vld [vmem:[#allocation2 + $0x10] sm:$0xff]
        %v338 = vld [vmem:[#allocation2 + $0x18] sm:$0xff]
        %v339 = vmul.f32 %v328, %v295
        %v340 = vmul.f32 %v330, %v296
        %v341 = vmul.f32 %v332, %v297
        %v342 = vmul.f32 %v334, %v298
        %v343 = vadd.f32 %v335, %v339
        %v344 = vadd.f32 %v336, %v340
        %v345 = vadd.f32 %v337, %v341
        %v346 = vadd.f32 %v338, %v342
        %347 = vst [vmem:[#allocation2] sm:$0xff] %v343
        %348 = vst [vmem:[#allocation2 + $0x8] sm:$0xff] %v344
        %349 = vst [vmem:[#allocation2 + $0x10] sm:$0xff] %v345
        %350 = vst [vmem:[#allocation2 + $0x18] sm:$0xff] %v346
        %v351 = vld [vmem:[#allocation3] sm:$0xff]
        %v352 = vld [vmem:[#allocation3 + $0x8] sm:$0xff]
        %v353 = vld [vmem:[#allocation3 + $0x10] sm:$0xff]
        %v354 = vld [vmem:[#allocation3 + $0x18] sm:$0xff]
        %v355 = vadd.f32 %v328, %v295
        %v356 = vadd.f32 %v330, %v296
        %v357 = vadd.f32 %v332, %v297
        %v358 = vadd.f32 %v334, %v298
        %v359 = vadd.f32 %v351, %v355
        %v360 = vadd.f32 %v352, %v356
        %v361 = vadd.f32 %v353, %v357
        %v362 = vadd.f32 %v354, %v358
        %363 = vst [vmem:[#allocation3] sm:$0xff] %v359
        %364 = vst [vmem:[#allocation3 + $0x8] sm:$0xff] %v360
        %365 = vst [vmem:[#allocation3 + $0x10] sm:$0xff] %v361
        %366 = vst [vmem:[#allocation3 + $0x18] sm:$0xff] %v362
        // Predicated region
        $region41: #{tpu_custom_call.1} parent=27 // pred_check
          %p367 = pneg %p274
        $region42: #{tpu_custom_call.1} parent=27 // pred_check_branch
          %369 = sbr.rel (%p367) target = $region44
        $region43: #{tpu_custom_call.1} parent=27 // pred_region
          %v370 = vld [vmem:[#allocation2] sm:$0xff]
          %v371 = vld [vmem:[#allocation2 + $0x8] sm:$0xff]
          %v372 = vld [vmem:[#allocation2 + $0x10] sm:$0xff]
          %v373 = vld [vmem:[#allocation2 + $0x18] sm:$0xff]
          %v374 = vadd.f32 %v370, %v371
          %v375 = vadd.f32 %v374, %v372
          %v376 = vadd.f32 %v375, %v373
          %v377 = vrot.slane %v376, 4
          %v378 = vadd.f32 %v376, %v377
          %v379 = vrot.slane %v378, 2
          %v380 = vadd.f32 %v378, %v379
          %v381 = vrot.slane %v380, 1
          %v382 = vadd.f32 %v380, %v381
          %383 = vst [vmem:[%s264] sm:$0x1] %v382
          %v384 = vld [vmem:[#allocation3] sm:$0xff]
          %v385 = vld [vmem:[#allocation3 + $0x8] sm:$0xff]
          %v386 = vld [vmem:[#allocation3 + $0x10] sm:$0xff]
          %v387 = vld [vmem:[#allocation3 + $0x18] sm:$0xff]
          %v388 = vadd.f32 %v384, %v385
          %v389 = vadd.f32 %v388, %v386
          %v390 = vadd.f32 %v389, %v387
          %v391 = vrot.slane %v390, 4
          %v392 = vadd.f32 %v390, %v391
          %v393 = vrot.slane %v392, 2
          %v394 = vadd.f32 %v392, %v393
          %v395 = vrot.slane %v394, 1
          %v396 = vadd.f32 %v394, %v395
          %397 = vst [vmem:[%s270] sm:$0x1] %v396
        $region44: #{tpu_custom_call.1} parent=27 // pred_fallthru
          _
        %s398 = sand.u32 %s116, 1
        %s399 = scalar_lea.sflag [#allocation6], %s398
        %s400 = sand.u32 %s116, 1
        %s401 = scalar_lea.vmem [#allocation9], %s400
        %s402 = sand.u32 %s144, 1
        %s403 = scalar_lea.sflag [#allocation11], %s402
        %s404 = sand.u32 %s144, 1
        %s405 = scalar_lea.vmem [#allocation10], %s404
        // Predicated region
        $region45: #{tpu_custom_call.1} parent=27 // pred_check
          %p406 = pneg %p126
        $region46: #{tpu_custom_call.1} parent=27 // pred_check_branch
          %408 = sbr.rel (%p406) target = $region48
        $region47: #{tpu_custom_call.1} parent=27 // pred_region
          %s410 = ssub.s32 16, 16
          %411 = vsyncadd %s399, %s410
          %s412 = smul.addr %s32, 2
          %s413 = sadd.s32 %s33, %s412
          %s414 = smul.addr %s413, 16
          %s415 = scalar_lea.hbm %s2, %s414
          %s417 = sshll.u32 %s401, 4
          %s418 = int_to_ptr.vmem [resolvable:$true] %s417
          %420 = dma.vmem_to_hbm [thread:$0]  %s418, 16, %s415, %s399
        $region48: #{tpu_custom_call.1} parent=27 // pred_fallthru
          _
        // Predicated region
        $region49: #{tpu_custom_call.1} parent=27 // pred_check
          %p421 = pneg %p154
        $region50: #{tpu_custom_call.1} parent=27 // pred_check_branch
          %423 = sbr.rel (%p421) target = $region52
        $region51: #{tpu_custom_call.1} parent=27 // pred_region
          %s425 = ssub.s32 16, 16
          %426 = vsyncadd %s403, %s425
          %s427 = smul.addr %s32, 2
          %s428 = sadd.s32 %s33, %s427
          %s429 = smul.addr %s428, 16
          %s430 = scalar_lea.hbm %s3, %s429
          %s432 = sshll.u32 %s405, 4
          %s433 = int_to_ptr.vmem [resolvable:$true] %s432
          %435 = dma.vmem_to_hbm [thread:$0]  %s433, 16, %s430, %s403
        $region52: #{tpu_custom_call.1} parent=27 // pred_fallthru
          _
      $region28: #{tpu_custom_call.1} parent=5 // pred_fallthru
        _
      %p436 = scmp.le.s32.totalorder 2, %s22
      // Predicated region
      $region53: #{tpu_custom_call.1} parent=5 // pred_check
        %p437 = pneg %p436
      $region54: #{tpu_custom_call.1} parent=5 // pred_check_branch
        %439 = sbr.rel (%p437) target = $region56
      $region55: #{tpu_custom_call.1} parent=5 // pred_region
        %s440 = ssub.s32 %s22, 2
        // Predicated region
        $region57: #{tpu_custom_call.1} parent=55 // pred_check
          %p441 = pneg %p132
        $region58: #{tpu_custom_call.1} parent=55 // pred_check_branch
          %443 = sbr.rel (%p441) target = $region60
        $region59: #{tpu_custom_call.1} parent=55 // pred_region
          %s444 = sand.u32 %s117, 1
          %s445 = scalar_lea.sflag [#allocation6], %s444
          %s446 = sand.u32 %s117, 1
          %s447 = scalar_lea.vmem [#allocation9], %s446
          %448 = dma.done %s445, 16
        $region60: #{tpu_custom_call.1} parent=55 // pred_fallthru
          _
        // Predicated region
        $region61: #{tpu_custom_call.1} parent=55 // pred_check
          %p449 = pneg %p160
        $region62: #{tpu_custom_call.1} parent=55 // pred_check_branch
          %451 = sbr.rel (%p449) target = $region64
        $region63: #{tpu_custom_call.1} parent=55 // pred_region
          %s452 = sand.u32 %s145, 1
          %s453 = scalar_lea.sflag [#allocation11], %s452
          %s454 = sand.u32 %s145, 1
          %s455 = scalar_lea.vmem [#allocation10], %s454
          %456 = dma.done %s453, 16
        $region64: #{tpu_custom_call.1} parent=55 // pred_fallthru
          _
      $region56: #{tpu_custom_call.1} parent=5 // pred_fallthru
        _
    $region6: #{tpu_custom_call.1} parent=1 // loop_footer
      %s26 = sadd.s32 1, %s22
    $region7: #{tpu_custom_call.1} parent=1 // loop_footer_branch
      %21 = sbr.rel target = $region3
    $region8: #{tpu_custom_call.1} parent=1 // loop_exit
      _
    %457 = vsyncpa [#allocation5], 1
    %s458 = scalar_lea.sflag [#allocation5], 1
    %459 = vsyncpa %s458, 1
    %460 = vsyncpa [#allocation8], 1
    %s461 = scalar_lea.sflag [#allocation8], 1
    %462 = vsyncpa %s461, 1
    %463 = vsyncpa [#allocation6], 1
    %s464 = scalar_lea.sflag [#allocation6], 1
    %465 = vsyncpa %s464, 1
    %466 = vsyncpa [#allocation11], 1
    %s467 = scalar_lea.sflag [#allocation11], 1
    %468 = vsyncpa %s467, 1

</llo_original>
